<compile_context>
chip_gen: v5e
topology: v5e:2x2
jax: 0.10.0
libtpu: 0.0.40
codegen_flags: <defaults>
</compile_context>

<pallas_src>
import functools

import jax
import jax.numpy as jnp
from jax.experimental import pallas as pl
from jax.experimental.pallas import tpu as pltpu


def _conv_bn_relu_kernel(xa_ref, xb_ref, w_ref, shift_ref, o_ref, xwin_ref,
                         *, taps, tm, halo):
    # xa_ref:    (TM, C)      bf16  flattened image rows [rb*TM, (rb+1)*TM)
    # xb_ref:    (TM, C)      bf16  flattened image rows [(rb+1)*TM, (rb+2)*TM)
    # w_ref:     (KT, OC)     bf16  BN-scaled conv weights, (kh, kw, c) row-major
    # shift_ref: (1, OC)      f32   beta + (bias - mean) * scale
    # o_ref:     (TM, OC)     bf16  TR output rows at padded width W (row-major)
    # xwin_ref:  (TM+HALO, C) bf16  scratch: contiguous input window incl. halo
    xwin_ref[0:tm, :] = xa_ref[...]
    if halo > 0:
        xwin_ref[tm:tm + halo, :] = xb_ref[0:halo, :]

    # In-VMEM im2col: one shifted (TM, C) slice per conv tap, concatenated
    # along the contraction dim -> LHS (TM, KH*KW*C).  One MXU matmul total.
    pieces = [xwin_ref[d:d + tm, :] for d in taps]
    lhs = pieces[0] if len(pieces) == 1 else jnp.concatenate(pieces, axis=1)

    acc = jnp.dot(lhs, w_ref[...], preferred_element_type=jnp.float32)
    o_ref[...] = jnp.maximum(acc + shift_ref[...], 0.0).astype(o_ref.dtype)


def _pick_row_block(oh, w, kh, target_m=256):
    """Output rows per grid step: a divisor of OH, >= KH, with TR*W >= target if possible."""
    divs = [d for d in range(1, oh + 1) if oh % d == 0 and d >= kh]
    if not divs:
        divs = [oh]
    for d in divs:                       # ascending: smallest block that hits target M
        if d * w >= target_m:
            return d
    return divs[-1]


def basic_conv2d(x, weight, bias, gamma, beta, running_mean, running_var,
                 eps=1e-5, return_nchw_f32=True):
    """Fused Conv2d(stride=1, padding=0) + BatchNorm2d(eval) + ReLU.

    x: (N, C, H, W) f32; weight: (OC, C, KH, KW); bias may be None.
    Returns (N, OC, OH, OW) f32 by default.  With return_nchw_f32=False the raw
    kernel output (N, OH, W, OC) bf16 is returned (columns >= OW are padding),
    avoiding the extra HBM pass for the slice/transpose/cast.
    """
    n, c, h, w = x.shape
    oc, c_w, kh, kw = weight.shape
    assert c_w == c, (c_w, c)
    oh, ow = h - kh + 1, w - kw + 1
    assert oh >= 1 and ow >= 1
    # TODO(synk): degenerate OH < KH images would need a deeper halo scheme.
    assert oh >= kh, (oh, kh)

    kt = kh * kw * c

    # Fold BatchNorm (eval) and the conv bias: the multiplicative scale goes
    # into the weights, everything additive into one per-channel shift.
    scale = gamma / jnp.sqrt(running_var + eps)                      # (OC,)
    if bias is None:
        bias = jnp.zeros((oc,), jnp.float32)
    shift = (beta + (bias - running_mean) * scale).reshape(1, oc).astype(jnp.float32)
    w_flat = jnp.transpose(weight * scale[:, None, None, None], (2, 3, 1, 0))
    w_flat = w_flat.reshape(kt, oc).astype(jnp.bfloat16)             # (KT, OC)

    # Row-block tiling of the flattened (H*W, C) image.  Each grid step
    # computes TR full output rows at the *padded* width W (the last KW-1
    # columns of each row are garbage and are sliced off afterwards), which
    # makes every conv tap a contiguous shift of the flattened image.
    tr = _pick_row_block(oh, w, kh)
    tm = tr * w                                   # matmul M per grid step
    nb = oh // tr                                 # row blocks per image
    halo = (kh - 1) * w + (kw - 1)                # extra rows needed per block
    assert halo <= tm

    # NCHW f32 -> flattened NHWC bf16, zero-padded by one extra row block so
    # the halo BlockSpec (block index rb+1) is always in bounds.
    x_flat = jnp.transpose(x, (0, 2, 3, 1)).reshape(n, h * w, c)
    x_flat = jnp.pad(x_flat, ((0, 0), (0, (nb + 1) * tm - h * w), (0, 0)))
    x_blk = x_flat.astype(jnp.bfloat16).reshape(n, nb + 1, tm, c)

    kernel = functools.partial(
        _conv_bn_relu_kernel,
        taps=tuple(i * w + j for i in range(kh) for j in range(kw)),
        tm=tm, halo=halo)

    out_blk = pl.pallas_call(
        kernel,
        out_shape=jax.ShapeDtypeStruct((n, nb, tm, oc), jnp.bfloat16),
        grid_spec=pltpu.PrefetchScalarGridSpec(
            num_scalar_prefetch=0,
            grid=(n, nb),
            in_specs=[
                # current row block
                pl.BlockSpec((None, None, tm, c), lambda b, rb: (b, rb, 0, 0)),
                # next row block (halo rows)
                pl.BlockSpec((None, None, tm, c), lambda b, rb: (b, rb + 1, 0, 0)),
                # flattened, BN-scaled weights (resident; tiny)
                pl.BlockSpec((kt, oc), lambda b, rb: (0, 0)),
                # per-channel shift
                pl.BlockSpec((1, oc), lambda b, rb: (0, 0)),
            ],
            out_specs=pl.BlockSpec((None, None, tm, oc),
                                   lambda b, rb: (b, rb, 0, 0)),
            scratch_shapes=[pltpu.VMEM((tm + halo, c), jnp.bfloat16)],
        ),
        compiler_params=pltpu.CompilerParams(
            dimension_semantics=("parallel", "parallel"),
            # Tiles are a few hundred KiB; explicit cap keeps us well inside
            # v7x's 64 MiB physical VMEM and raises v5e's 16 MiB default.
            vmem_limit_bytes=32 * 1024 * 1024,
        ),
        cost_estimate=pl.CostEstimate(
            flops=2 * n * oh * w * kt * oc,
            transcendentals=0,
            bytes_accessed=(2 * x_blk.size * 2 + w_flat.size * 2
                            + shift.size * 4 + n * nb * tm * oc * 2)),
    )(x_blk, x_blk, w_flat, shift)

    out_nhwc = out_blk.reshape(n, oh, w, oc)
    if not return_nchw_f32:
        return out_nhwc                            # (N, OH, W, OC) bf16, cols >= OW are padding
    return jnp.transpose(out_nhwc[:, :, :ow, :], (0, 3, 1, 2)).astype(jnp.float32)


def _reference(x, weight, bias, gamma, beta, running_mean, running_var, eps=1e-5):
    y = jax.lax.conv_general_dilated(
        x, weight, window_strides=(1, 1), padding="VALID",
        dimension_numbers=("NCHW", "OIHW", "NCHW"))
    if bias is not None:
        y = y + bias.reshape(1, -1, 1, 1)
    y = (y - running_mean.reshape(1, -1, 1, 1)) / jnp.sqrt(
        running_var.reshape(1, -1, 1, 1) + eps)
    y = y * gamma.reshape(1, -1, 1, 1) + beta.reshape(1, -1, 1, 1)
    return jnp.maximum(y, 0.0)


if __name__ == "__main__":
    # Small shapes consistent with BasicConv2d(in_channels=4, out_channels=8, kernel_size=3)
    N, C, H, W = 2, 4, 16, 16
    OC, KH, KW = 8, 3, 3

    key = jax.random.PRNGKey(0)
    k_x, k_w, k_b, k_g, k_be, k_m, k_v = jax.random.split(key, 7)

    x = jax.random.normal(k_x, (N, C, H, W), dtype=jnp.float32)
    weight = 0.1 * jax.random.normal(k_w, (OC, C, KH, KW), dtype=jnp.float32)
    bias = 0.1 * jax.random.normal(k_b, (OC,), dtype=jnp.float32)
    gamma = 1.0 + 0.1 * jax.random.normal(k_g, (OC,), dtype=jnp.float32)
    beta = 0.1 * jax.random.normal(k_be, (OC,), dtype=jnp.float32)
    running_mean = 0.1 * jax.random.normal(k_m, (OC,), dtype=jnp.float32)
    running_var = jnp.abs(1.0 + 0.1 * jax.random.normal(k_v, (OC,), dtype=jnp.float32))

    out = basic_conv2d(x, weight, bias, gamma, beta, running_mean, running_var)
    out = jax.block_until_ready(out)

    ref = _reference(x, weight, bias, gamma, beta, running_mean, running_var)
    assert out.shape == (N, OC, H - KH + 1, W - KW + 1), out.shape
    # bf16 MXU operands + bf16 output store -> compare with bf16-level tolerance.
    max_err = float(jnp.max(jnp.abs(out - ref)))
    assert max_err < 5e-2, max_err

    print("KERNEL_OK")
</pallas_src>

<mosaic_0001>
module attributes {stable_mosaic.version = 11 : i64} {
  func.func @_conv_bn_relu_kernel(%arg0: i32, %arg1: i32, %arg2: memref<1x1x224x4xbf16, #tpu.memory_space<vmem>>, %arg3: memref<1x1x224x4xbf16, #tpu.memory_space<vmem>>, %arg4: memref<36x8xbf16, #tpu.memory_space<vmem>>, %arg5: memref<1x8xf32, #tpu.memory_space<vmem>>, %arg6: memref<1x1x224x8xbf16, #tpu.memory_space<vmem>>, %arg7: memref<258x4xbf16, #tpu.memory_space<vmem>>) attributes {dimension_semantics = [#tpu.dimension_semantics<parallel>, #tpu.dimension_semantics<parallel>], iteration_bounds = array<i64: 2, 1>, scalar_prefetch = 0 : i64, scratch_operands = 1 : i64, tpu.core_type = #tpu.core_type<tc>, window_params = [{transform_indices = @transform_0, window_bounds = array<i64: 1, 1, 224, 4>}, {transform_indices = @transform_1, window_bounds = array<i64: 1, 1, 224, 4>}, {pipeline_mode = #tpu.pipeline_mode<synchronous>, transform_indices = @transform_2, window_bounds = array<i64: 36, 8>}, {pipeline_mode = #tpu.pipeline_mode<synchronous>, transform_indices = @transform_3, window_bounds = array<i64: 1, 8>}, {transform_indices = @transform_4, window_bounds = array<i64: 1, 1, 224, 8>}]} {
    %c0 = arith.constant 0 : index
    %c0_0 = arith.constant 0 : index
    %c0_1 = arith.constant 0 : index
    %c0_2 = arith.constant 0 : index
    %0 = vector.load %arg2[%c0, %c0_0, %c0_1, %c0_2] : memref<1x1x224x4xbf16, #tpu.memory_space<vmem>>, vector<1x1x224x4xbf16>
    %1 = vector.shape_cast %0 : vector<1x1x224x4xbf16> to vector<224x4xbf16>
    %c0_3 = arith.constant 0 : index
    %c0_4 = arith.constant 0 : index
    %2 = vector.load %arg7[%c0_3, %c0_4] : memref<258x4xbf16, #tpu.memory_space<vmem>>, vector<224x4xbf16>
    tpu.vector_store %arg7[%c0_3, %c0_4], %1 {strides = array<i32>} : memref<258x4xbf16, #tpu.memory_space<vmem>>, vector<224x4xbf16>,
    %c0_5 = arith.constant 0 : index
    %c0_6 = arith.constant 0 : index
    %c0_7 = arith.constant 0 : index
    %c0_8 = arith.constant 0 : index
    %3 = vector.load %arg3[%c0_5, %c0_6, %c0_7, %c0_8] : memref<1x1x224x4xbf16, #tpu.memory_space<vmem>>, vector<1x1x34x4xbf16>
    %4 = vector.shape_cast %3 : vector<1x1x34x4xbf16> to vector<34x4xbf16>
    %c224 = arith.constant 224 : index
    %c0_9 = arith.constant 0 : index
    %5 = vector.load %arg7[%c224, %c0_9] : memref<258x4xbf16, #tpu.memory_space<vmem>>, vector<34x4xbf16>
    tpu.vector_store %arg7[%c224, %c0_9], %4 {strides = array<i32>} : memref<258x4xbf16, #tpu.memory_space<vmem>>, vector<34x4xbf16>,
    %c0_10 = arith.constant 0 : index
    %c0_11 = arith.constant 0 : index
    %6 = vector.load %arg7[%c0_10, %c0_11] : memref<258x4xbf16, #tpu.memory_space<vmem>>, vector<224x4xbf16>
    %c1 = arith.constant 1 : index
    %c0_12 = arith.constant 0 : index
    %7 = vector.load %arg7[%c1, %c0_12] : memref<258x4xbf16, #tpu.memory_space<vmem>>, vector<224x4xbf16>
    %c2 = arith.constant 2 : index
    %c0_13 = arith.constant 0 : index
    %8 = vector.load %arg7[%c2, %c0_13] : memref<258x4xbf16, #tpu.memory_space<vmem>>, vector<224x4xbf16>
    %c16 = arith.constant 16 : index
    %c0_14 = arith.constant 0 : index
    %9 = vector.load %arg7[%c16, %c0_14] : memref<258x4xbf16, #tpu.memory_space<vmem>>, vector<224x4xbf16>
    %c17 = arith.constant 17 : index
    %c0_15 = arith.constant 0 : index
    %10 = vector.load %arg7[%c17, %c0_15] : memref<258x4xbf16, #tpu.memory_space<vmem>>, vector<224x4xbf16>
    %c18 = arith.constant 18 : index
    %c0_16 = arith.constant 0 : index
    %11 = vector.load %arg7[%c18, %c0_16] : memref<258x4xbf16, #tpu.memory_space<vmem>>, vector<224x4xbf16>
    %c32 = arith.constant 32 : index
    %c0_17 = arith.constant 0 : index
    %12 = vector.load %arg7[%c32, %c0_17] : memref<258x4xbf16, #tpu.memory_space<vmem>>, vector<224x4xbf16>
    %c33 = arith.constant 33 : index
    %c0_18 = arith.constant 0 : index
    %13 = vector.load %arg7[%c33, %c0_18] : memref<258x4xbf16, #tpu.memory_space<vmem>>, vector<224x4xbf16>
    %c34 = arith.constant 34 : index
    %c0_19 = arith.constant 0 : index
    %14 = vector.load %arg7[%c34, %c0_19] : memref<258x4xbf16, #tpu.memory_space<vmem>>, vector<224x4xbf16>
    %15 = tpu.concatenate %6, %7, %8, %9, %10, %11, %12, %13, %14 in 1 : vector<224x4xbf16>, vector<224x4xbf16>, vector<224x4xbf16>, vector<224x4xbf16>, vector<224x4xbf16>, vector<224x4xbf16>, vector<224x4xbf16>, vector<224x4xbf16>, vector<224x4xbf16> -> vector<224x36xbf16>
    %c0_20 = arith.constant 0 : index
    %c0_21 = arith.constant 0 : index
    %16 = vector.load %arg4[%c0_20, %c0_21] : memref<36x8xbf16, #tpu.memory_space<vmem>>, vector<36x8xbf16>
    %cst = arith.constant dense<0.000000e+00> : vector<224x8xf32>
    %17 = tpu.matmul %15, %16, %cst {dimension_numbers = #tpu.dot_dimension_numbers<[1], [0], [0], [1], [0, 0, 1, 1], [], []>} : vector<224x36xbf16>, vector<36x8xbf16>, vector<224x8xf32> -> vector<224x8xf32>
    %c0_22 = arith.constant 0 : index
    %c0_23 = arith.constant 0 : index
    %18 = vector.load %arg5[%c0_22, %c0_23] : memref<1x8xf32, #tpu.memory_space<vmem>>, vector<1x8xf32>
    %19 = vector.broadcast %18 : vector<1x8xf32> to vector<224x8xf32>
    %20 = arith.addf %17, %19 : vector<224x8xf32>
    %cst_24 = arith.constant 0.000000e+00 : f32
    %21 = vector.broadcast %cst_24 : f32 to vector<224x8xf32>
    %22 = arith.maximumf %20, %21 : vector<224x8xf32>
    %23 = arith.truncf %22 : vector<224x8xf32> to vector<224x8xbf16>
    %c0_25 = arith.constant 0 : index
    %c0_26 = arith.constant 0 : index
    %c0_27 = arith.constant 0 : index
    %c0_28 = arith.constant 0 : index
    %24 = vector.load %arg6[%c0_25, %c0_26, %c0_27, %c0_28] : memref<1x1x224x8xbf16, #tpu.memory_space<vmem>>, vector<1x1x224x8xbf16>
    %25 = vector.shape_cast %24 : vector<1x1x224x8xbf16> to vector<224x8xbf16>
    %26 = vector.shape_cast %23 : vector<224x8xbf16> to vector<1x1x224x8xbf16>
    tpu.vector_store %arg6[%c0_25, %c0_26, %c0_27, %c0_28], %26 {strides = array<i32>} : memref<1x1x224x8xbf16, #tpu.memory_space<vmem>>, vector<1x1x224x8xbf16>,
    return
  }
  func.func @transform_0(%arg0: i32, %arg1: i32) -> (i32, i32, i32, i32) {
    %c0_i32 = arith.constant 0 : i32
    %c0_i32_0 = arith.constant 0 : i32
    %c0_i32_1 = arith.constant 0 : i32
    return %arg0, %arg1, %c0_i32, %c0_i32_0 : i32, i32, i32, i32
  }
  func.func @transform_1(%arg0: i32, %arg1: i32) -> (i32, i32, i32, i32) {
    %c1_i32 = arith.constant 1 : i32
    %0 = arith.addi %arg1, %c1_i32 : i32
    %c0_i32 = arith.constant 0 : i32
    %c0_i32_0 = arith.constant 0 : i32
    %c0_i32_1 = arith.constant 0 : i32
    return %arg0, %0, %c0_i32, %c0_i32_0 : i32, i32, i32, i32
  }
  func.func @transform_2(%arg0: i32, %arg1: i32) -> (i32, i32) {
    %c0_i32 = arith.constant 0 : i32
    %c0_i32_0 = arith.constant 0 : i32
    %c0_i32_1 = arith.constant 0 : i32
    return %c0_i32, %c0_i32_0 : i32, i32
  }
  func.func @transform_3(%arg0: i32, %arg1: i32) -> (i32, i32) {
    %c0_i32 = arith.constant 0 : i32
    %c0_i32_0 = arith.constant 0 : i32
    %c0_i32_1 = arith.constant 0 : i32
    return %c0_i32, %c0_i32_0 : i32, i32
  }
  func.func @transform_4(%arg0: i32, %arg1: i32) -> (i32, i32, i32, i32) {
    %c0_i32 = arith.constant 0 : i32
    %c0_i32_0 = arith.constant 0 : i32
    %c0_i32_1 = arith.constant 0 : i32
    return %arg0, %arg1, %c0_i32, %c0_i32_0 : i32, i32, i32, i32
  }
}

</mosaic_0001>

<llo_original>
// kernel: tpu_custom_call.1
$region0: #{tpu_custom_call.1}
  #allocation0 [shape = 'u32[]', space=smem, size = 0x4, offset = 0x4, fixed_abs, tag = 'smem constant byte address 0x4 - core index']
  #allocation1 [shape = 'u32[72,128]{1,0:T(1,128)}', space=vmem, size = 0x9000, scoped, tag = 'internal scratch']
  #allocation2 [shape = 'bf16[258,4]{1,0:T(8,128)(2,1)}', space=vmem, size = 0x10800, scoped, tag = 'scratch operand']
  %s0 = inlined_call_operand.vmem [shape: bf16[2,2,224,4], index: 0, kind: input, shape index: {}]
  %s1 = inlined_call_operand.vmem [shape: bf16[2,2,224,4], index: 1, kind: input, shape index: {}]
  %s2 = inlined_call_operand.vmem [shape: bf16[36,8], index: 2, kind: input, shape index: {}]
  %s3 = inlined_call_operand.vmem [shape: f32[1,8], index: 3, kind: input, shape index: {}]
  %s4 = inlined_call_operand.vmem [shape: bf16[2,1,224,8], index: 4, kind: output, shape index: {}]
  %s5 = sld [smem:[#allocation0]]
  $region49: #{tpu_custom_call.1} parent=0
    _
  %s7 = ssub.s32 1, %s5
  %s8 = scalar_select 0, %s7, %s5
  loop: start=0, step=1, limit=4
  $region2: #{tpu_custom_call.1} parent=0 // loop_pre_header
    _
  $region3: #{tpu_custom_call.1} parent=0 // loop_header
    %s10 = sphi 0, %s14
    %p11 = scmp.ge.s32.totalorder %s10, 4
    %s17 = sphi 0, %s29
    %s18 = sphi 0, %s25
    %s19 = sphi 0, %s17
    %s20 = sphi 0, %s18
    %s21 = sphi 0, %s19
    %s22 = sphi 0, %s20
    %s34 = sphi 0, %s36
    %s37 = sphi 0, %s34
    %s38 = sphi 0, %s37
    %s54 = sphi 0, %s38
    %s64 = sphi 0, %s66
    %s67 = sphi 0, %s64
    %s68 = sphi 0, %s67
    %s84 = sphi 0, %s68
    %s88 = sphi 0, %s88
    %s90 = sphi 0, %s88
    %s91 = sphi 0, %s90
    %s105 = sphi 0, %s91
    %s109 = sphi 0, %s109
    %s111 = sphi 0, %s109
    %s112 = sphi 0, %s111
    %s126 = sphi 0, %s112
    %s134 = sphi 0, %s136
    %s137 = sphi 0, %s134
    %s138 = sphi 0, %s137
    %s154 = sphi 0, %s138
  $region4: #{tpu_custom_call.1} parent=0 // loop_header_branch
    %13 = sbr.rel (%p11) target = $region8
  $region5: #{tpu_custom_call.1} parent=0 // loop_body
    %s15 = ssub.s32 %s10, 1
    %s16 = ssub.s32 %s10, 2
    %s23 = sadd.s32 1, %s18
    %p24 = scmp.ge.s32.totalorder %s23, 1
    %s25 = scalar_select %p24, 0, %s23
    %s26 = sadd.s32 1, %s17
    %s27 = scalar_select %p24, %s26, %s17
    %p28 = scmp.ge.s32.totalorder %s27, 2
    %s29 = scalar_select %p28, 0, %s27
    %s30 = ssub.s32 %s17, %s29
    %s31 = ssub.s32 %s18, %s25
    %s32 = sor.u32 %s30, %s31
    %p33 = scmp.eq.s32.totalorder %s32, 0
    %s35 = sadd.s32 %s34, 1
    %s36 = scalar_select %p33, %s34, %s35
    %p39 = pneg %p33
    %p40 = scmp.eq.s32.totalorder %s10, 1
    %p41 = por %p39, %p40
    %p42 = scmp.ne.s32.totalorder %s34, %s37
    %p43 = scmp.eq.s32.totalorder %s10, 0
    %p44 = por %p42, %p43
    %p45 = scmp.ne.s32.totalorder %s34, %s37
    %p46 = scmp.eq.s32.totalorder %s15, 1
    %p47 = por %p45, %p46
    %p48 = scmp.ne.s32.totalorder %s37, %s38
    %p49 = scmp.eq.s32.totalorder %s15, 0
    %p50 = por %p48, %p49
    %p51 = scmp.ne.s32.totalorder %s37, %s38
    %p52 = scmp.eq.s32.totalorder %s16, 1
    %p53 = por %p51, %p52
    %p55 = scmp.ne.s32.totalorder %s38, %s54
    %p56 = scmp.eq.s32.totalorder %s16, 0
    %p57 = por %p55, %p56
    %s58 = sadd.s32 %s18, 1
    %s59 = sadd.s32 %s25, 1
    %s60 = ssub.s32 %s17, %s29
    %s61 = ssub.s32 %s58, %s59
    %s62 = sor.u32 %s60, %s61
    %p63 = scmp.eq.s32.totalorder %s62, 0
    %s65 = sadd.s32 %s64, 1
    %s66 = scalar_select %p63, %s64, %s65
    %p69 = pneg %p63
    %p70 = scmp.eq.s32.totalorder %s10, 1
    %p71 = por %p69, %p70
    %p72 = scmp.ne.s32.totalorder %s64, %s67
    %p73 = scmp.eq.s32.totalorder %s10, 0
    %p74 = por %p72, %p73
    %p75 = scmp.ne.s32.totalorder %s64, %s67
    %p76 = scmp.eq.s32.totalorder %s15, 1
    %p77 = por %p75, %p76
    %p78 = scmp.ne.s32.totalorder %s67, %s68
    %p79 = scmp.eq.s32.totalorder %s15, 0
    %p80 = por %p78, %p79
    %p81 = scmp.ne.s32.totalorder %s67, %s68
    %p82 = scmp.eq.s32.totalorder %s16, 1
    %p83 = por %p81, %p82
    %p85 = scmp.ne.s32.totalorder %s68, %s84
    %p86 = scmp.eq.s32.totalorder %s16, 0
    %p87 = por %p85, %p86
    %s89 = sadd.s32 %s88, 1
    %p92 = scmp.eq.s32.totalorder %s10, 1
    %p93 = scmp.ne.s32.totalorder %s88, %s90
    %p94 = scmp.eq.s32.totalorder %s10, 0
    %p95 = por %p93, %p94
    %p96 = scmp.ne.s32.totalorder %s88, %s90
    %p97 = scmp.eq.s32.totalorder %s15, 1
    %p98 = por %p96, %p97
    %p99 = scmp.ne.s32.totalorder %s90, %s91
    %p100 = scmp.eq.s32.totalorder %s15, 0
    %p101 = por %p99, %p100
    %p102 = scmp.ne.s32.totalorder %s90, %s91
    %p103 = scmp.eq.s32.totalorder %s16, 1
    %p104 = por %p102, %p103
    %p106 = scmp.ne.s32.totalorder %s91, %s105
    %p107 = scmp.eq.s32.totalorder %s16, 0
    %p108 = por %p106, %p107
    %s110 = sadd.s32 %s109, 1
    %p113 = scmp.eq.s32.totalorder %s10, 1
    %p114 = scmp.ne.s32.totalorder %s109, %s111
    %p115 = scmp.eq.s32.totalorder %s10, 0
    %p116 = por %p114, %p115
    %p117 = scmp.ne.s32.totalorder %s109, %s111
    %p118 = scmp.eq.s32.totalorder %s15, 1
    %p119 = por %p117, %p118
    %p120 = scmp.ne.s32.totalorder %s111, %s112
    %p121 = scmp.eq.s32.totalorder %s15, 0
    %p122 = por %p120, %p121
    %p123 = scmp.ne.s32.totalorder %s111, %s112
    %p124 = scmp.eq.s32.totalorder %s16, 1
    %p125 = por %p123, %p124
    %p127 = scmp.ne.s32.totalorder %s112, %s126
    %p128 = scmp.eq.s32.totalorder %s16, 0
    %p129 = por %p127, %p128
    %s130 = ssub.s32 %s17, %s29
    %s131 = ssub.s32 %s18, %s25
    %s132 = sor.u32 %s130, %s131
    %p133 = scmp.eq.s32.totalorder %s132, 0
    %s135 = sadd.s32 %s134, 1
    %s136 = scalar_select %p133, %s134, %s135
    %p139 = pneg %p133
    %p140 = scmp.eq.s32.totalorder %s10, 1
    %p141 = por %p139, %p140
    %p142 = scmp.ne.s32.totalorder %s134, %s137
    %p143 = scmp.eq.s32.totalorder %s10, 0
    %p144 = por %p142, %p143
    %p145 = scmp.ne.s32.totalorder %s134, %s137
    %p146 = scmp.eq.s32.totalorder %s15, 1
    %p147 = por %p145, %p146
    %p148 = scmp.ne.s32.totalorder %s137, %s138
    %p149 = scmp.eq.s32.totalorder %s15, 0
    %p150 = por %p148, %p149
    %p151 = scmp.ne.s32.totalorder %s137, %s138
    %p152 = scmp.eq.s32.totalorder %s16, 1
    %p153 = por %p151, %p152
    %p155 = scmp.ne.s32.totalorder %s138, %s154
    %p156 = scmp.eq.s32.totalorder %s16, 0
    %p157 = por %p155, %p156
    %p158 = scmp.le.s32.totalorder 1, %s10
    %p159 = scmp.lt.s32.totalorder %s10, 3
    %p160 = pnand %p158, %p159
    %p161 = pneg %p160
    // Predicated region
    $region9: #{tpu_custom_call.1} parent=5 // pred_check
      _
    $region10: #{tpu_custom_call.1} parent=5 // pred_check_branch
      %163 = sbr.rel (%p160) target = $region12
    $region11: #{tpu_custom_call.1} parent=5 // pred_region
      %s164 = ssub.s32 %s10, 1
      // Predicated region
      $region13: #{tpu_custom_call.1} parent=11 // pred_check
        %p165 = pneg %p101
      $region14: #{tpu_custom_call.1} parent=11 // pred_check_branch
        %167 = sbr.rel (%p165) target = $region16
      $region15: #{tpu_custom_call.1} parent=11 // pred_region
        _
      $region16: #{tpu_custom_call.1} parent=11 // pred_fallthru
        _
      // Predicated region
      $region17: #{tpu_custom_call.1} parent=11 // pred_check
        %p168 = pneg %p122
      $region18: #{tpu_custom_call.1} parent=11 // pred_check_branch
        %170 = sbr.rel (%p168) target = $region20
      $region19: #{tpu_custom_call.1} parent=11 // pred_region
        _
      $region20: #{tpu_custom_call.1} parent=11 // pred_fallthru
        _
    $region12: #{tpu_custom_call.1} parent=5 // pred_fallthru
      _
    %p171 = scmp.lt.s32.totalorder %s10, 2
    // Predicated region
    $region21: #{tpu_custom_call.1} parent=5 // pred_check
      %p172 = pneg %p171
    $region22: #{tpu_custom_call.1} parent=5 // pred_check_branch
      %174 = sbr.rel (%p172) target = $region24
    $region23: #{tpu_custom_call.1} parent=5 // pred_region
      // Predicated region
      $region25: #{tpu_custom_call.1} parent=23 // pred_check
        %p175 = pneg %p44
      $region26: #{tpu_custom_call.1} parent=23 // pred_check_branch
        %177 = sbr.rel (%p175) target = $region28
      $region27: #{tpu_custom_call.1} parent=23 // pred_region
        %p178 = scmp.lt.s32.totalorder %s17, 1
        %s179 = scalar_select %p178, %s17, 1
        %p180 = scmp.lt.s32.totalorder %s18, 1
        %s181 = scalar_select %p180, %s18, 1
        %s182 = smul.addr %s181, 28
        %s183 = smul.addr %s179, 56
        %s184 = sadd.s32 %s182, %s183
        %s185 = smul.addr %s184, 4
        %s186 = scalar_lea.vmem %s0, %s185
      $region28: #{tpu_custom_call.1} parent=23 // pred_fallthru
        _
      // Predicated region
      $region29: #{tpu_custom_call.1} parent=23 // pred_check
        %p187 = pneg %p74
      $region30: #{tpu_custom_call.1} parent=23 // pred_check_branch
        %189 = sbr.rel (%p187) target = $region32
      $region31: #{tpu_custom_call.1} parent=23 // pred_region
        %s190 = sadd.s32 %s18, 1
        %p191 = scmp.lt.s32.totalorder %s17, 1
        %s192 = scalar_select %p191, %s17, 1
        %p193 = scmp.lt.s32.totalorder %s190, 1
        %s194 = scalar_select %p193, %s190, 1
        %s195 = smul.addr %s194, 28
        %s196 = smul.addr %s192, 56
        %s197 = sadd.s32 %s195, %s196
        %s198 = smul.addr %s197, 4
        %s199 = scalar_lea.vmem %s1, %s198
        %s200 = sadd.s32 %s18, 1
      $region32: #{tpu_custom_call.1} parent=23 // pred_fallthru
        _
    $region24: #{tpu_custom_call.1} parent=5 // pred_fallthru
      _
    %p201 = scmp.le.s32.totalorder 1, %s10
    %p202 = scmp.lt.s32.totalorder %s10, 3
    %p203 = pnand %p201, %p202
    %p204 = pneg %p203
    // Predicated region
    $region33: #{tpu_custom_call.1} parent=5 // pred_check
      _
    $region34: #{tpu_custom_call.1} parent=5 // pred_check_branch
      %206 = sbr.rel (%p203) target = $region36
    $region35: #{tpu_custom_call.1} parent=5 // pred_region
      %s207 = ssub.s32 %s10, 1
      %p208 = scmp.lt.s32.totalorder %s19, 1
      %s209 = scalar_select %p208, %s19, 1
      %p210 = scmp.lt.s32.totalorder %s20, 1
      %s211 = scalar_select %p210, %s20, 1
      %s212 = smul.addr %s211, 28
      %s213 = smul.addr %s209, 56
      %s214 = sadd.s32 %s212, %s213
      %s215 = smul.addr %s214, 4
      %s216 = scalar_lea.vmem %s0, %s215
      %p217 = pneg %p50
      %p218 = pneg %p47
      %s219 = sadd.s32 %s20, 1
      %p220 = scmp.lt.s32.totalorder %s19, 1
      %s221 = scalar_select %p220, %s19, 1
      %p222 = scmp.lt.s32.totalorder %s219, 1
      %s223 = scalar_select %p222, %s219, 1
      %s224 = smul.addr %s223, 28
      %s225 = smul.addr %s221, 56
      %s226 = sadd.s32 %s224, %s225
      %s227 = smul.addr %s226, 4
      %s228 = scalar_lea.vmem %s1, %s227
      %p229 = pneg %p80
      %p230 = pneg %p77
      %p231 = pneg %p101
      %p232 = pneg %p98
      %p233 = pneg %p122
      %p234 = pneg %p119
      %p235 = pneg %p150
      %p236 = pneg %p147
      %p237 = scmp.lt.s32.totalorder %s19, 1
      %s238 = scalar_select %p237, %s19, 1
      %p239 = scmp.lt.s32.totalorder %s20, 0
      %s240 = scalar_select %p239, %s20, 0
      %s241 = smul.addr %s240, 28
      %s242 = smul.addr %s238, 28
      %s243 = sadd.s32 %s241, %s242
      %s244 = smul.addr %s243, 4
      %s245 = scalar_lea.vmem %s4, %s244
      %p246 = scmp.lt.s32.totalorder %s19, 1
      %s247 = scalar_select %p246, %s19, 1
      %p248 = scmp.lt.s32.totalorder %s20, 1
      %s249 = scalar_select %p248, %s20, 1
      %s250 = smul.addr %s249, 28
      %s251 = smul.addr %s247, 56
      %s252 = sadd.s32 %s250, %s251
      %s253 = smul.addr %s252, 4
      %s254 = scalar_lea.vmem %s0, %s253
      %s255 = sadd.s32 %s20, 1
      %p256 = scmp.lt.s32.totalorder %s19, 1
      %s257 = scalar_select %p256, %s19, 1
      %p258 = scmp.lt.s32.totalorder %s255, 1
      %s259 = scalar_select %p258, %s255, 1
      %s260 = smul.addr %s259, 28
      %s261 = smul.addr %s257, 56
      %s262 = sadd.s32 %s260, %s261
      %s263 = smul.addr %s262, 4
      %s264 = scalar_lea.vmem %s1, %s263
      %s265 = sadd.s32 %s20, 1
      %p266 = scmp.lt.s32.totalorder %s19, 1
      %s267 = scalar_select %p266, %s19, 1
      %p268 = scmp.lt.s32.totalorder %s20, 0
      %s269 = scalar_select %p268, %s20, 0
      %s270 = smul.addr %s269, 28
      %s271 = smul.addr %s267, 28
      %s272 = sadd.s32 %s270, %s271
      %s273 = smul.addr %s272, 4
      %s274 = scalar_lea.vmem %s4, %s273
      %v276 = vld [vmem:[%s254] sm:$0xf]
      %v277 = vld [vmem:[%s254 + $0x4] sm:$0xf]
      %v278 = vld [vmem:[%s254 + $0x8] sm:$0xf]
      %v279 = vld [vmem:[%s254 + $0xc] sm:$0xf]
      %v280 = vld [vmem:[%s254 + $0x10] sm:$0xf]
      %v281 = vld [vmem:[%s254 + $0x14] sm:$0xf]
      %v282 = vld [vmem:[%s254 + $0x18] sm:$0xf]
      %v283 = vld [vmem:[%s254 + $0x1c] sm:$0xf]
      %v284 = vld [vmem:[%s254 + $0x20] sm:$0xf]
      %v285 = vld [vmem:[%s254 + $0x24] sm:$0xf]
      %v286 = vld [vmem:[%s254 + $0x28] sm:$0xf]
      %v287 = vld [vmem:[%s254 + $0x2c] sm:$0xf]
      %v288 = vld [vmem:[%s254 + $0x30] sm:$0xf]
      %v289 = vld [vmem:[%s254 + $0x34] sm:$0xf]
      %v290 = vld [vmem:[%s254 + $0x38] sm:$0xf]
      %v291 = vld [vmem:[%s254 + $0x3c] sm:$0xf]
      %v292 = vld [vmem:[%s254 + $0x40] sm:$0xf]
      %v293 = vld [vmem:[%s254 + $0x44] sm:$0xf]
      %v294 = vld [vmem:[%s254 + $0x48] sm:$0xf]
      %v295 = vld [vmem:[%s254 + $0x4c] sm:$0xf]
      %v296 = vld [vmem:[%s254 + $0x50] sm:$0xf]
      %v297 = vld [vmem:[%s254 + $0x54] sm:$0xf]
      %v298 = vld [vmem:[%s254 + $0x58] sm:$0xf]
      %v299 = vld [vmem:[%s254 + $0x5c] sm:$0xf]
      %v300 = vld [vmem:[%s254 + $0x60] sm:$0xf]
      %v301 = vld [vmem:[%s254 + $0x64] sm:$0xf]
      %v302 = vld [vmem:[%s254 + $0x68] sm:$0xf]
      %v303 = vld [vmem:[%s254 + $0x6c] sm:$0xf]
      %vm304 = vcmask 27648
      %305 = vst.msk [vmem:[#allocation2] sm:$0xf] %vm304, %v276
      %306 = vst.msk [vmem:[#allocation2 + $0x4] sm:$0xf] %vm304, %v277
      %307 = vst.msk [vmem:[#allocation2 + $0x8] sm:$0xf] %vm304, %v278
      %308 = vst.msk [vmem:[#allocation2 + $0xc] sm:$0xf] %vm304, %v279
      %309 = vst.msk [vmem:[#allocation2 + $0x10] sm:$0xf] %vm304, %v280
      %310 = vst.msk [vmem:[#allocation2 + $0x14] sm:$0xf] %vm304, %v281
      %311 = vst.msk [vmem:[#allocation2 + $0x18] sm:$0xf] %vm304, %v282
      %312 = vst.msk [vmem:[#allocation2 + $0x1c] sm:$0xf] %vm304, %v283
      %313 = vst.msk [vmem:[#allocation2 + $0x20] sm:$0xf] %vm304, %v284
      %314 = vst.msk [vmem:[#allocation2 + $0x24] sm:$0xf] %vm304, %v285
      %315 = vst.msk [vmem:[#allocation2 + $0x28] sm:$0xf] %vm304, %v286
      %316 = vst.msk [vmem:[#allocation2 + $0x2c] sm:$0xf] %vm304, %v287
      %317 = vst.msk [vmem:[#allocation2 + $0x30] sm:$0xf] %vm304, %v288
      %318 = vst.msk [vmem:[#allocation2 + $0x34] sm:$0xf] %vm304, %v289
      %319 = vst.msk [vmem:[#allocation2 + $0x38] sm:$0xf] %vm304, %v290
      %320 = vst.msk [vmem:[#allocation2 + $0x3c] sm:$0xf] %vm304, %v291
      %321 = vst.msk [vmem:[#allocation2 + $0x40] sm:$0xf] %vm304, %v292
      %322 = vst.msk [vmem:[#allocation2 + $0x44] sm:$0xf] %vm304, %v293
      %323 = vst.msk [vmem:[#allocation2 + $0x48] sm:$0xf] %vm304, %v294
      %324 = vst.msk [vmem:[#allocation2 + $0x4c] sm:$0xf] %vm304, %v295
      %325 = vst.msk [vmem:[#allocation2 + $0x50] sm:$0xf] %vm304, %v296
      %326 = vst.msk [vmem:[#allocation2 + $0x54] sm:$0xf] %vm304, %v297
      %327 = vst.msk [vmem:[#allocation2 + $0x58] sm:$0xf] %vm304, %v298
      %328 = vst.msk [vmem:[#allocation2 + $0x5c] sm:$0xf] %vm304, %v299
      %329 = vst.msk [vmem:[#allocation2 + $0x60] sm:$0xf] %vm304, %v300
      %330 = vst.msk [vmem:[#allocation2 + $0x64] sm:$0xf] %vm304, %v301
      %331 = vst.msk [vmem:[#allocation2 + $0x68] sm:$0xf] %vm304, %v302
      %332 = vst.msk [vmem:[#allocation2 + $0x6c] sm:$0xf] %vm304, %v303
      %v333 = vld [vmem:[%s264] sm:$0xf]
      %v334 = vld [vmem:[%s264 + $0x4] sm:$0xf]
      %v335 = vld [vmem:[%s264 + $0x8] sm:$0xf]
      %v336 = vld [vmem:[%s264 + $0xc] sm:$0xf]
      %v337 = vld [vmem:[%s264 + $0x10] sm:$0x1]
      %338 = vst.msk [vmem:[#allocation2 + $0x70] sm:$0xf] %vm304, %v333
      %339 = vst.msk [vmem:[#allocation2 + $0x74] sm:$0xf] %vm304, %v334
      %340 = vst.msk [vmem:[#allocation2 + $0x78] sm:$0xf] %vm304, %v335
      %341 = vst.msk [vmem:[#allocation2 + $0x7c] sm:$0xf] %vm304, %v336
      %vm342 = vcmask 24576
      %343 = vst.msk [vmem:[#allocation2 + $0x80] sm:$0x1] %vm342, %v337
      %v344 = vld [vmem:[#allocation2] sm:$0xf]
      %v345 = vld [vmem:[#allocation2 + $0x4] sm:$0xf]
      %v346 = vld [vmem:[#allocation2 + $0x8] sm:$0xf]
      %v347 = vld [vmem:[#allocation2 + $0xc] sm:$0xf]
      %v348 = vld [vmem:[#allocation2 + $0x10] sm:$0xf]
      %v349 = vld [vmem:[#allocation2 + $0x14] sm:$0xf]
      %v350 = vld [vmem:[#allocation2 + $0x18] sm:$0xf]
      %v351 = vld [vmem:[#allocation2 + $0x1c] sm:$0xf]
      %v352 = vld [vmem:[#allocation2 + $0x20] sm:$0xf]
      %v353 = vld [vmem:[#allocation2 + $0x24] sm:$0xf]
      %v354 = vld [vmem:[#allocation2 + $0x28] sm:$0xf]
      %v355 = vld [vmem:[#allocation2 + $0x2c] sm:$0xf]
      %v356 = vld [vmem:[#allocation2 + $0x30] sm:$0xf]
      %v357 = vld [vmem:[#allocation2 + $0x34] sm:$0xf]
      %v358 = vld [vmem:[#allocation2 + $0x38] sm:$0xf]
      %v359 = vld [vmem:[#allocation2 + $0x3c] sm:$0xf]
      %v360 = vld [vmem:[#allocation2 + $0x40] sm:$0xf]
      %v361 = vld [vmem:[#allocation2 + $0x44] sm:$0xf]
      %v362 = vld [vmem:[#allocation2 + $0x48] sm:$0xf]
      %v363 = vld [vmem:[#allocation2 + $0x4c] sm:$0xf]
      %v364 = vld [vmem:[#allocation2 + $0x50] sm:$0xf]
      %v365 = vld [vmem:[#allocation2 + $0x54] sm:$0xf]
      %v366 = vld [vmem:[#allocation2 + $0x58] sm:$0xf]
      %v367 = vld [vmem:[#allocation2 + $0x5c] sm:$0xf]
      %v368 = vld [vmem:[#allocation2 + $0x60] sm:$0xf]
      %v369 = vld [vmem:[#allocation2 + $0x64] sm:$0xf]
      %v370 = vld [vmem:[#allocation2 + $0x68] sm:$0xf]
      %v371 = vld [vmem:[#allocation2 + $0x6c] sm:$0xf]
      %v372 = vld [vmem:[#allocation2 + $0x70] sm:$0x1]
      %v373 = vld [vmem:[#allocation2] sm:$0xe]
      %v374 = vld [vmem:[#allocation2 + $0x70] sm:$0xf]
      %v375 = vld [vmem:[#allocation2 + $0x74] sm:$0xf]
      %v376 = vld [vmem:[#allocation2 + $0x78] sm:$0x1]
      %v377 = vld [vmem:[#allocation2 + $0x8] sm:$0xe]
      %v378 = vld [vmem:[#allocation2 + $0x78] sm:$0xf]
      %v379 = vld [vmem:[#allocation2 + $0x7c] sm:$0xf]
      %v380 = vld [vmem:[#allocation2 + $0x80] sm:$0x1]
      %v381 = vld [vmem:[#allocation2 + $0x10] sm:$0xe]
      %v410 = vunpack.c.l.b16 %v344
      %v411 = vunpack.c.l.b16 %v345
      %v412 = vunpack.c.l.b16 %v346
      %v413 = vunpack.c.l.b16 %v347
      %v414 = vunpack.c.l.b16 %v348
      %v415 = vunpack.c.l.b16 %v349
      %v416 = vunpack.c.l.b16 %v350
      %v417 = vunpack.c.l.b16 %v351
      %v418 = vunpack.c.l.b16 %v352
      %v419 = vunpack.c.l.b16 %v353
      %v420 = vunpack.c.l.b16 %v354
      %v421 = vunpack.c.l.b16 %v355
      %v422 = vunpack.c.l.b16 %v356
      %v423 = vunpack.c.l.b16 %v357
      %v424 = vunpack.c.l.b16 %v358
      %v425 = vunpack.c.l.b16 %v359
      %v426 = vunpack.c.l.b16 %v360
      %v427 = vunpack.c.l.b16 %v361
      %v428 = vunpack.c.l.b16 %v362
      %v429 = vunpack.c.l.b16 %v363
      %v430 = vunpack.c.l.b16 %v364
      %v431 = vunpack.c.l.b16 %v365
      %v432 = vunpack.c.l.b16 %v366
      %v433 = vunpack.c.l.b16 %v367
      %v434 = vunpack.c.l.b16 %v368
      %v435 = vunpack.c.l.b16 %v369
      %v436 = vunpack.c.l.b16 %v370
      %v437 = vunpack.c.l.b16 %v371
      %v438 = vpack.c.b16 %v411, %v410
      %v439 = vpack.c.b16 %v413, %v412
      %v440 = vpack.c.b16 %v415, %v414
      %v441 = vpack.c.b16 %v417, %v416
      %v442 = vpack.c.b16 %v419, %v418
      %v443 = vpack.c.b16 %v421, %v420
      %v444 = vpack.c.b16 %v423, %v422
      %v445 = vpack.c.b16 %v425, %v424
      %v446 = vpack.c.b16 %v427, %v426
      %v447 = vpack.c.b16 %v429, %v428
      %v448 = vpack.c.b16 %v431, %v430
      %v449 = vpack.c.b16 %v433, %v432
      %v450 = vpack.c.b16 %v435, %v434
      %v451 = vpack.c.b16 %v437, %v436
      %v453 = vunpack.c.l.b16 %v372
      %v454 = vpack.c.b16 %v453, %v453
      %vm455 = vsmask.f32 7424
      %v457 = vshrl.u32 %v438, 16
      %v459 = vshll.u32 %v438, 16
      %v461 = vrot.slane %v459, 1
      %v462 = vor.u32 %v457, %v461
      %v464 = vshll.u32 %v439, 16
      %v466 = vrot.slane %v464, 1
      %v467 = vsel %vm455, %v462, %v466
      %v468 = vshrl.u32 %v439, 16
      %v470 = vor.u32 %v468, %v466
      %v472 = vshll.u32 %v440, 16
      %v474 = vrot.slane %v472, 1
      %v475 = vsel %vm455, %v470, %v474
      %v476 = vshrl.u32 %v440, 16
      %v478 = vor.u32 %v476, %v474
      %v480 = vshll.u32 %v441, 16
      %v482 = vrot.slane %v480, 1
      %v483 = vsel %vm455, %v478, %v482
      %v484 = vshrl.u32 %v441, 16
      %v486 = vor.u32 %v484, %v482
      %v488 = vshll.u32 %v442, 16
      %v490 = vrot.slane %v488, 1
      %v491 = vsel %vm455, %v486, %v490
      %v492 = vshrl.u32 %v442, 16
      %v494 = vor.u32 %v492, %v490
      %v496 = vshll.u32 %v443, 16
      %v498 = vrot.slane %v496, 1
      %v499 = vsel %vm455, %v494, %v498
      %v500 = vshrl.u32 %v443, 16
      %v502 = vor.u32 %v500, %v498
      %v504 = vshll.u32 %v444, 16
      %v506 = vrot.slane %v504, 1
      %v507 = vsel %vm455, %v502, %v506
      %v508 = vshrl.u32 %v444, 16
      %v510 = vor.u32 %v508, %v506
      %v512 = vshll.u32 %v445, 16
      %v514 = vrot.slane %v512, 1
      %v515 = vsel %vm455, %v510, %v514
      %v516 = vshrl.u32 %v445, 16
      %v518 = vor.u32 %v516, %v514
      %v520 = vshll.u32 %v446, 16
      %v522 = vrot.slane %v520, 1
      %v523 = vsel %vm455, %v518, %v522
      %v524 = vshrl.u32 %v446, 16
      %v526 = vor.u32 %v524, %v522
      %v528 = vshll.u32 %v447, 16
      %v530 = vrot.slane %v528, 1
      %v531 = vsel %vm455, %v526, %v530
      %v532 = vshrl.u32 %v447, 16
      %v534 = vor.u32 %v532, %v530
      %v536 = vshll.u32 %v448, 16
      %v538 = vrot.slane %v536, 1
      %v539 = vsel %vm455, %v534, %v538
      %v540 = vshrl.u32 %v448, 16
      %v542 = vor.u32 %v540, %v538
      %v544 = vshll.u32 %v449, 16
      %v546 = vrot.slane %v544, 1
      %v547 = vsel %vm455, %v542, %v546
      %v548 = vshrl.u32 %v449, 16
      %v550 = vor.u32 %v548, %v546
      %v552 = vshll.u32 %v450, 16
      %v554 = vrot.slane %v552, 1
      %v555 = vsel %vm455, %v550, %v554
      %v556 = vshrl.u32 %v450, 16
      %v558 = vor.u32 %v556, %v554
      %v560 = vshll.u32 %v451, 16
      %v562 = vrot.slane %v560, 1
      %v563 = vsel %vm455, %v558, %v562
      %v564 = vshrl.u32 %v451, 16
      %v566 = vor.u32 %v564, %v562
      %v568 = vshll.u32 %v454, 16
      %v570 = vrot.slane %v568, 1
      %v571 = vsel %vm455, %v566, %v570
      %572 = vrot.lane.b32.xlu0 %v467, 4
      %v573 = vpop.permute.xlu0 %572
      %574 = vrot.lane.b32.xlu0 %v475, 4
      %v575 = vpop.permute.xlu0 %574
      %576 = vrot.lane.b32.xlu0 %v483, 4
      %v577 = vpop.permute.xlu0 %576
      %578 = vrot.lane.b32.xlu0 %v491, 4
      %v579 = vpop.permute.xlu0 %578
      %580 = vrot.lane.b32.xlu0 %v499, 4
      %v581 = vpop.permute.xlu0 %580
      %582 = vrot.lane.b32.xlu0 %v507, 4
      %v583 = vpop.permute.xlu0 %582
      %584 = vrot.lane.b32.xlu0 %v515, 4
      %v585 = vpop.permute.xlu0 %584
      %586 = vrot.lane.b32.xlu0 %v523, 4
      %v587 = vpop.permute.xlu0 %586
      %588 = vrot.lane.b32.xlu0 %v531, 4
      %v589 = vpop.permute.xlu0 %588
      %590 = vrot.lane.b32.xlu0 %v539, 4
      %v591 = vpop.permute.xlu0 %590
      %592 = vrot.lane.b32.xlu0 %v547, 4
      %v593 = vpop.permute.xlu0 %592
      %594 = vrot.lane.b32.xlu0 %v555, 4
      %v595 = vpop.permute.xlu0 %594
      %596 = vrot.lane.b32.xlu0 %v563, 4
      %v597 = vpop.permute.xlu0 %596
      %598 = vrot.lane.b32.xlu0 %v571, 4
      %v599 = vpop.permute.xlu0 %598
      %v601 = vunpack.c.l.b16 %v373
      %v602 = vpack.c.b16 %v411, %v601
      %vm603 = vcmask 1046528
      %v604 = vrot.slane %v602, 1
      %v605 = vrot.slane %v439, 1
      %v606 = vsel %vm603, %v604, %v605
      %v607 = vrot.slane %v440, 1
      %v608 = vsel %vm603, %v605, %v607
      %v609 = vrot.slane %v441, 1
      %v610 = vsel %vm603, %v607, %v609
      %v611 = vrot.slane %v442, 1
      %v612 = vsel %vm603, %v609, %v611
      %v613 = vrot.slane %v443, 1
      %v614 = vsel %vm603, %v611, %v613
      %v615 = vrot.slane %v444, 1
      %v616 = vsel %vm603, %v613, %v615
      %v617 = vrot.slane %v445, 1
      %v618 = vsel %vm603, %v615, %v617
      %v619 = vrot.slane %v446, 1
      %v620 = vsel %vm603, %v617, %v619
      %v621 = vrot.slane %v447, 1
      %v622 = vsel %vm603, %v619, %v621
      %v623 = vrot.slane %v448, 1
      %v624 = vsel %vm603, %v621, %v623
      %v625 = vrot.slane %v449, 1
      %v626 = vsel %vm603, %v623, %v625
      %v627 = vrot.slane %v450, 1
      %v628 = vsel %vm603, %v625, %v627
      %v629 = vrot.slane %v451, 1
      %v630 = vsel %vm603, %v627, %v629
      %v631 = vrot.slane %v454, 1
      %v632 = vsel %vm603, %v629, %v631
      %633 = vrot.lane.b32.xlu0 %v606, 8
      %v634 = vpop.permute.xlu0 %633
      %635 = vrot.lane.b32.xlu0 %v608, 8
      %v636 = vpop.permute.xlu0 %635
      %637 = vrot.lane.b32.xlu0 %v610, 8
      %v638 = vpop.permute.xlu0 %637
      %639 = vrot.lane.b32.xlu0 %v612, 8
      %v640 = vpop.permute.xlu0 %639
      %641 = vrot.lane.b32.xlu0 %v614, 8
      %v642 = vpop.permute.xlu0 %641
      %643 = vrot.lane.b32.xlu0 %v616, 8
      %v644 = vpop.permute.xlu0 %643
      %645 = vrot.lane.b32.xlu0 %v618, 8
      %v646 = vpop.permute.xlu0 %645
      %647 = vrot.lane.b32.xlu0 %v620, 8
      %v648 = vpop.permute.xlu0 %647
      %649 = vrot.lane.b32.xlu0 %v622, 8
      %v650 = vpop.permute.xlu0 %649
      %651 = vrot.lane.b32.xlu0 %v624, 8
      %v652 = vpop.permute.xlu0 %651
      %653 = vrot.lane.b32.xlu0 %v626, 8
      %v654 = vpop.permute.xlu0 %653
      %655 = vrot.lane.b32.xlu0 %v628, 8
      %v656 = vpop.permute.xlu0 %655
      %657 = vrot.lane.b32.xlu0 %v630, 8
      %v658 = vpop.permute.xlu0 %657
      %659 = vrot.lane.b32.xlu0 %v632, 8
      %v660 = vpop.permute.xlu0 %659
      %v663 = vunpack.c.l.b16 %v374
      %v664 = vunpack.c.l.b16 %v375
      %v665 = vpack.c.b16 %v664, %v663
      %666 = vrot.lane.b32.xlu0 %v439, 12
      %v667 = vpop.permute.xlu0 %666
      %668 = vrot.lane.b32.xlu0 %v440, 12
      %v669 = vpop.permute.xlu0 %668
      %670 = vrot.lane.b32.xlu0 %v441, 12
      %v671 = vpop.permute.xlu0 %670
      %672 = vrot.lane.b32.xlu0 %v442, 12
      %v673 = vpop.permute.xlu0 %672
      %674 = vrot.lane.b32.xlu0 %v443, 12
      %v675 = vpop.permute.xlu0 %674
      %676 = vrot.lane.b32.xlu0 %v444, 12
      %v677 = vpop.permute.xlu0 %676
      %678 = vrot.lane.b32.xlu0 %v445, 12
      %v679 = vpop.permute.xlu0 %678
      %680 = vrot.lane.b32.xlu0 %v446, 12
      %v681 = vpop.permute.xlu0 %680
      %682 = vrot.lane.b32.xlu0 %v447, 12
      %v683 = vpop.permute.xlu0 %682
      %684 = vrot.lane.b32.xlu0 %v448, 12
      %v685 = vpop.permute.xlu0 %684
      %686 = vrot.lane.b32.xlu0 %v449, 12
      %v687 = vpop.permute.xlu0 %686
      %688 = vrot.lane.b32.xlu0 %v450, 12
      %v689 = vpop.permute.xlu0 %688
      %690 = vrot.lane.b32.xlu0 %v451, 12
      %v691 = vpop.permute.xlu0 %690
      %692 = vrot.lane.b32.xlu0 %v665, 12
      %v693 = vpop.permute.xlu0 %692
      %v695 = vunpack.c.l.b16 %v376
      %v696 = vpack.c.b16 %v695, %v695
      %v698 = vshll.u32 %v665, 16
      %v700 = vrot.slane %v698, 1
      %v701 = vsel %vm455, %v566, %v700
      %v702 = vshrl.u32 %v665, 16
      %v704 = vor.u32 %v702, %v700
      %v706 = vshll.u32 %v696, 16
      %v708 = vrot.slane %v706, 1
      %v709 = vsel %vm455, %v704, %v708
      %710 = vrot.lane.b32.xlu0 %v475, 16
      %v711 = vpop.permute.xlu0 %710
      %712 = vrot.lane.b32.xlu0 %v483, 16
      %v713 = vpop.permute.xlu0 %712
      %714 = vrot.lane.b32.xlu0 %v491, 16
      %v715 = vpop.permute.xlu0 %714
      %716 = vrot.lane.b32.xlu0 %v499, 16
      %v717 = vpop.permute.xlu0 %716
      %718 = vrot.lane.b32.xlu0 %v507, 16
      %v719 = vpop.permute.xlu0 %718
      %720 = vrot.lane.b32.xlu0 %v515, 16
      %v721 = vpop.permute.xlu0 %720
      %722 = vrot.lane.b32.xlu0 %v523, 16
      %v723 = vpop.permute.xlu0 %722
      %724 = vrot.lane.b32.xlu0 %v531, 16
      %v725 = vpop.permute.xlu0 %724
      %726 = vrot.lane.b32.xlu0 %v539, 16
      %v727 = vpop.permute.xlu0 %726
      %728 = vrot.lane.b32.xlu0 %v547, 16
      %v729 = vpop.permute.xlu0 %728
      %730 = vrot.lane.b32.xlu0 %v555, 16
      %v731 = vpop.permute.xlu0 %730
      %732 = vrot.lane.b32.xlu0 %v563, 16
      %v733 = vpop.permute.xlu0 %732
      %734 = vrot.lane.b32.xlu0 %v701, 16
      %v735 = vpop.permute.xlu0 %734
      %736 = vrot.lane.b32.xlu0 %v709, 16
      %v737 = vpop.permute.xlu0 %736
      %v739 = vunpack.c.l.b16 %v377
      %v740 = vpack.c.b16 %v413, %v739
      %v741 = vrot.slane %v740, 1
      %v742 = vsel %vm603, %v741, %v607
      %v743 = vrot.slane %v665, 1
      %v744 = vsel %vm603, %v629, %v743
      %v745 = vrot.slane %v696, 1
      %v746 = vsel %vm603, %v743, %v745
      %747 = vrot.lane.b32.xlu0 %v742, 20
      %v748 = vpop.permute.xlu0 %747
      %749 = vrot.lane.b32.xlu0 %v610, 20
      %v750 = vpop.permute.xlu0 %749
      %751 = vrot.lane.b32.xlu0 %v612, 20
      %v752 = vpop.permute.xlu0 %751
      %753 = vrot.lane.b32.xlu0 %v614, 20
      %v754 = vpop.permute.xlu0 %753
      %755 = vrot.lane.b32.xlu0 %v616, 20
      %v756 = vpop.permute.xlu0 %755
      %757 = vrot.lane.b32.xlu0 %v618, 20
      %v758 = vpop.permute.xlu0 %757
      %759 = vrot.lane.b32.xlu0 %v620, 20
      %v760 = vpop.permute.xlu0 %759
      %761 = vrot.lane.b32.xlu0 %v622, 20
      %v762 = vpop.permute.xlu0 %761
      %763 = vrot.lane.b32.xlu0 %v624, 20
      %v764 = vpop.permute.xlu0 %763
      %765 = vrot.lane.b32.xlu0 %v626, 20
      %v766 = vpop.permute.xlu0 %765
      %767 = vrot.lane.b32.xlu0 %v628, 20
      %v768 = vpop.permute.xlu0 %767
      %769 = vrot.lane.b32.xlu0 %v630, 20
      %v770 = vpop.permute.xlu0 %769
      %771 = vrot.lane.b32.xlu0 %v744, 20
      %v772 = vpop.permute.xlu0 %771
      %773 = vrot.lane.b32.xlu0 %v746, 20
      %v774 = vpop.permute.xlu0 %773
      %v777 = vunpack.c.l.b16 %v378
      %v778 = vunpack.c.l.b16 %v379
      %v779 = vpack.c.b16 %v778, %v777
      %780 = vrot.lane.b32.xlu0 %v440, 24
      %v781 = vpop.permute.xlu0 %780
      %782 = vrot.lane.b32.xlu0 %v441, 24
      %v783 = vpop.permute.xlu0 %782
      %784 = vrot.lane.b32.xlu0 %v442, 24
      %v785 = vpop.permute.xlu0 %784
      %786 = vrot.lane.b32.xlu0 %v443, 24
      %v787 = vpop.permute.xlu0 %786
      %788 = vrot.lane.b32.xlu0 %v444, 24
      %v789 = vpop.permute.xlu0 %788
      %790 = vrot.lane.b32.xlu0 %v445, 24
      %v791 = vpop.permute.xlu0 %790
      %792 = vrot.lane.b32.xlu0 %v446, 24
      %v793 = vpop.permute.xlu0 %792
      %794 = vrot.lane.b32.xlu0 %v447, 24
      %v795 = vpop.permute.xlu0 %794
      %796 = vrot.lane.b32.xlu0 %v448, 24
      %v797 = vpop.permute.xlu0 %796
      %798 = vrot.lane.b32.xlu0 %v449, 24
      %v799 = vpop.permute.xlu0 %798
      %800 = vrot.lane.b32.xlu0 %v450, 24
      %v801 = vpop.permute.xlu0 %800
      %802 = vrot.lane.b32.xlu0 %v451, 24
      %v803 = vpop.permute.xlu0 %802
      %804 = vrot.lane.b32.xlu0 %v665, 24
      %v805 = vpop.permute.xlu0 %804
      %806 = vrot.lane.b32.xlu0 %v779, 24
      %v807 = vpop.permute.xlu0 %806
      %v809 = vunpack.c.l.b16 %v380
      %v810 = vpack.c.b16 %v809, %v809
      %v812 = vshll.u32 %v779, 16
      %v814 = vrot.slane %v812, 1
      %v815 = vsel %vm455, %v704, %v814
      %v816 = vshrl.u32 %v779, 16
      %v818 = vor.u32 %v816, %v814
      %v820 = vshll.u32 %v810, 16
      %v822 = vrot.slane %v820, 1
      %v823 = vsel %vm455, %v818, %v822
      %824 = vrot.lane.b32.xlu0 %v483, 28
      %v825 = vpop.permute.xlu0 %824
      %826 = vrot.lane.b32.xlu0 %v491, 28
      %v827 = vpop.permute.xlu0 %826
      %828 = vrot.lane.b32.xlu0 %v499, 28
      %v829 = vpop.permute.xlu0 %828
      %830 = vrot.lane.b32.xlu0 %v507, 28
      %v831 = vpop.permute.xlu0 %830
      %832 = vrot.lane.b32.xlu0 %v515, 28
      %v833 = vpop.permute.xlu0 %832
      %834 = vrot.lane.b32.xlu0 %v523, 28
      %v835 = vpop.permute.xlu0 %834
      %836 = vrot.lane.b32.xlu0 %v531, 28
      %v837 = vpop.permute.xlu0 %836
      %838 = vrot.lane.b32.xlu0 %v539, 28
      %v839 = vpop.permute.xlu0 %838
      %840 = vrot.lane.b32.xlu0 %v547, 28
      %v841 = vpop.permute.xlu0 %840
      %842 = vrot.lane.b32.xlu0 %v555, 28
      %v843 = vpop.permute.xlu0 %842
      %844 = vrot.lane.b32.xlu0 %v563, 28
      %v845 = vpop.permute.xlu0 %844
      %846 = vrot.lane.b32.xlu0 %v701, 28
      %v847 = vpop.permute.xlu0 %846
      %848 = vrot.lane.b32.xlu0 %v815, 28
      %v849 = vpop.permute.xlu0 %848
      %850 = vrot.lane.b32.xlu0 %v823, 28
      %v851 = vpop.permute.xlu0 %850
      %v853 = vunpack.c.l.b16 %v381
      %v854 = vpack.c.b16 %v415, %v853
      %v855 = vrot.slane %v854, 1
      %v856 = vsel %vm603, %v855, %v609
      %v857 = vrot.slane %v779, 1
      %v858 = vsel %vm603, %v743, %v857
      %v859 = vrot.slane %v810, 1
      %v860 = vsel %vm603, %v857, %v859
      %861 = vrot.lane.b32.xlu0 %v856, 32
      %v862 = vpop.permute.xlu0 %861
      %863 = vrot.lane.b32.xlu0 %v612, 32
      %v864 = vpop.permute.xlu0 %863
      %865 = vrot.lane.b32.xlu0 %v614, 32
      %v866 = vpop.permute.xlu0 %865
      %867 = vrot.lane.b32.xlu0 %v616, 32
      %v868 = vpop.permute.xlu0 %867
      %869 = vrot.lane.b32.xlu0 %v618, 32
      %v870 = vpop.permute.xlu0 %869
      %871 = vrot.lane.b32.xlu0 %v620, 32
      %v872 = vpop.permute.xlu0 %871
      %873 = vrot.lane.b32.xlu0 %v622, 32
      %v874 = vpop.permute.xlu0 %873
      %875 = vrot.lane.b32.xlu0 %v624, 32
      %v876 = vpop.permute.xlu0 %875
      %877 = vrot.lane.b32.xlu0 %v626, 32
      %v878 = vpop.permute.xlu0 %877
      %879 = vrot.lane.b32.xlu0 %v628, 32
      %v880 = vpop.permute.xlu0 %879
      %881 = vrot.lane.b32.xlu0 %v630, 32
      %v882 = vpop.permute.xlu0 %881
      %883 = vrot.lane.b32.xlu0 %v744, 32
      %v884 = vpop.permute.xlu0 %883
      %885 = vrot.lane.b32.xlu0 %v858, 32
      %v886 = vpop.permute.xlu0 %885
      %887 = vrot.lane.b32.xlu0 %v860, 32
      %v888 = vpop.permute.xlu0 %887
      %vm889 = vcmask 31744
      %v891 = vsel %vm889, %v438, %v573
      %v893 = vsel %vm889, %v439, %v575
      %v895 = vsel %vm889, %v440, %v577
      %v897 = vsel %vm889, %v441, %v579
      %v899 = vsel %vm889, %v442, %v581
      %v901 = vsel %vm889, %v443, %v583
      %v903 = vsel %vm889, %v444, %v585
      %v905 = vsel %vm889, %v445, %v587
      %v907 = vsel %vm889, %v446, %v589
      %v909 = vsel %vm889, %v447, %v591
      %v911 = vsel %vm889, %v448, %v593
      %v913 = vsel %vm889, %v449, %v595
      %v915 = vsel %vm889, %v450, %v597
      %v917 = vsel %vm889, %v451, %v599
      %vm918 = vcmask 64512
      %v920 = vsel %vm918, %v891, %v634
      %v922 = vsel %vm918, %v893, %v636
      %v924 = vsel %vm918, %v895, %v638
      %v926 = vsel %vm918, %v897, %v640
      %v928 = vsel %vm918, %v899, %v642
      %v930 = vsel %vm918, %v901, %v644
      %v932 = vsel %vm918, %v903, %v646
      %v934 = vsel %vm918, %v905, %v648
      %v936 = vsel %vm918, %v907, %v650
      %v938 = vsel %vm918, %v909, %v652
      %v940 = vsel %vm918, %v911, %v654
      %v942 = vsel %vm918, %v913, %v656
      %v944 = vsel %vm918, %v915, %v658
      %v946 = vsel %vm918, %v917, %v660
      %vm947 = vcmask 97280
      %v949 = vsel %vm947, %v920, %v667
      %v951 = vsel %vm947, %v922, %v669
      %v953 = vsel %vm947, %v924, %v671
      %v955 = vsel %vm947, %v926, %v673
      %v957 = vsel %vm947, %v928, %v675
      %v959 = vsel %vm947, %v930, %v677
      %v961 = vsel %vm947, %v932, %v679
      %v963 = vsel %vm947, %v934, %v681
      %v965 = vsel %vm947, %v936, %v683
      %v967 = vsel %vm947, %v938, %v685
      %v969 = vsel %vm947, %v940, %v687
      %v971 = vsel %vm947, %v942, %v689
      %v973 = vsel %vm947, %v944, %v691
      %v975 = vsel %vm947, %v946, %v693
      %vm976 = vcmask 130048
      %v978 = vsel %vm976, %v949, %v711
      %v980 = vsel %vm976, %v951, %v713
      %v982 = vsel %vm976, %v953, %v715
      %v984 = vsel %vm976, %v955, %v717
      %v986 = vsel %vm976, %v957, %v719
      %v988 = vsel %vm976, %v959, %v721
      %v990 = vsel %vm976, %v961, %v723
      %v992 = vsel %vm976, %v963, %v725
      %v994 = vsel %vm976, %v965, %v727
      %v996 = vsel %vm976, %v967, %v729
      %v998 = vsel %vm976, %v969, %v731
      %v1000 = vsel %vm976, %v971, %v733
      %v1002 = vsel %vm976, %v973, %v735
      %v1004 = vsel %vm976, %v975, %v737
      %vm1005 = vcmask 162816
      %v1007 = vsel %vm1005, %v978, %v748
      %v1009 = vsel %vm1005, %v980, %v750
      %v1011 = vsel %vm1005, %v982, %v752
      %v1013 = vsel %vm1005, %v984, %v754
      %v1015 = vsel %vm1005, %v986, %v756
      %v1017 = vsel %vm1005, %v988, %v758
      %v1019 = vsel %vm1005, %v990, %v760
      %v1021 = vsel %vm1005, %v992, %v762
      %v1023 = vsel %vm1005, %v994, %v764
      %v1025 = vsel %vm1005, %v996, %v766
      %v1027 = vsel %vm1005, %v998, %v768
      %v1029 = vsel %vm1005, %v1000, %v770
      %v1031 = vsel %vm1005, %v1002, %v772
      %v1033 = vsel %vm1005, %v1004, %v774
      %vm1034 = vcmask 195584
      %v1036 = vsel %vm1034, %v1007, %v781
      %v1038 = vsel %vm1034, %v1009, %v783
      %v1040 = vsel %vm1034, %v1011, %v785
      %v1042 = vsel %vm1034, %v1013, %v787
      %v1044 = vsel %vm1034, %v1015, %v789
      %v1046 = vsel %vm1034, %v1017, %v791
      %v1048 = vsel %vm1034, %v1019, %v793
      %v1050 = vsel %vm1034, %v1021, %v795
      %v1052 = vsel %vm1034, %v1023, %v797
      %v1054 = vsel %vm1034, %v1025, %v799
      %v1056 = vsel %vm1034, %v1027, %v801
      %v1058 = vsel %vm1034, %v1029, %v803
      %v1060 = vsel %vm1034, %v1031, %v805
      %v1062 = vsel %vm1034, %v1033, %v807
      %vm1063 = vcmask 228352
      %v1065 = vsel %vm1063, %v1036, %v825
      %v1067 = vsel %vm1063, %v1038, %v827
      %v1069 = vsel %vm1063, %v1040, %v829
      %v1071 = vsel %vm1063, %v1042, %v831
      %v1073 = vsel %vm1063, %v1044, %v833
      %v1075 = vsel %vm1063, %v1046, %v835
      %v1077 = vsel %vm1063, %v1048, %v837
      %v1079 = vsel %vm1063, %v1050, %v839
      %v1081 = vsel %vm1063, %v1052, %v841
      %v1083 = vsel %vm1063, %v1054, %v843
      %v1085 = vsel %vm1063, %v1056, %v845
      %v1087 = vsel %vm1063, %v1058, %v847
      %v1089 = vsel %vm1063, %v1060, %v849
      %v1091 = vsel %vm1063, %v1062, %v851
      %vm1092 = vcmask 261120
      %v1094 = vsel %vm1092, %v1065, %v862
      %v1096 = vsel %vm1092, %v1067, %v864
      %v1098 = vsel %vm1092, %v1069, %v866
      %v1100 = vsel %vm1092, %v1071, %v868
      %v1102 = vsel %vm1092, %v1073, %v870
      %v1104 = vsel %vm1092, %v1075, %v872
      %v1106 = vsel %vm1092, %v1077, %v874
      %v1108 = vsel %vm1092, %v1079, %v876
      %v1110 = vsel %vm1092, %v1081, %v878
      %v1112 = vsel %vm1092, %v1083, %v880
      %v1114 = vsel %vm1092, %v1085, %v882
      %v1116 = vsel %vm1092, %v1087, %v884
      %v1118 = vsel %vm1092, %v1089, %v886
      %v1120 = vsel %vm1092, %v1091, %v888
      %v1121 = vld [vmem:[%s2] sm:$0xf]
      %v1122 = vld [vmem:[%s2 + $0x4] sm:$0xf]
      %v1123 = vld [vmem:[%s2 + $0x8] sm:$0xf]
      %v1124 = vld [vmem:[%s2 + $0xc] sm:$0xf]
      %v1125 = vld [vmem:[%s2 + $0x10] sm:$0x3]
      %v1126 = vld [vmem:[%s3] sm:$0x1]
      %v1128 = vperm.slane %v1126, 0
      %v1135 = vunpack.c.l.b16 %v1121
      %v1136 = vunpack.c.l.b16 %v1122
      %v1137 = vunpack.c.l.b16 %v1123
      %v1138 = vunpack.c.l.b16 %v1124
      %v1139 = vunpack.c.l.b16 %v1125
      %v1140 = vpack.c.b16 %v1136, %v1135
      %v1141 = vpack.c.b16 %v1138, %v1137
      %v1142 = vpack.c.b16 %v1139, %v1139
      %vm1145 = vcmask 293888
      %v1146 = vsel %vm1145, %v1094, 0
      %v1148 = vsel %vm1145, %v1096, 0
      %v1150 = vsel %vm1145, %v1098, 0
      %v1152 = vsel %vm1145, %v1100, 0
      %v1154 = vsel %vm1145, %v1102, 0
      %v1156 = vsel %vm1145, %v1104, 0
      %v1158 = vsel %vm1145, %v1106, 0
      %v1160 = vsel %vm1145, %v1108, 0
      %v1162 = vsel %vm1145, %v1110, 0
      %v1164 = vsel %vm1145, %v1112, 0
      %v1166 = vsel %vm1145, %v1114, 0
      %v1168 = vsel %vm1145, %v1116, 0
      %v1170 = vsel %vm1145, %v1118, 0
      %v1172 = vsel %vm1145, %v1120, 0
      %vm1174 = vcmask 1041408
      %v1176 = vsel %vm1174, %v1142, 0
      %1178 = vmatpush.bf16.msra.mxu0 0
      %1179 = vmatpush.bf16.msra.mxu0 0
      %1180 = vmatpush.bf16.msra.mxu0 0
      %1181 = vmatpush.bf16.msra.mxu0 0
      %1182 = vmatpush.bf16.msra.mxu0 0
      %1183 = vmatpush.bf16.msra.mxu0 %v1176
      %1184 = vmatpush.bf16.msra.mxu0 %v1141
      %1185 = vmatpush.bf16.msra.mxu0 %v1140
      %1186 = vmatmul.bf16.gmra.mxu0 %v1146
      %v1187 = vpop.f32.mrf.mxu0
      %v1188 = vadd.f32 %v1128, %v1187
      %v1189 = vpop.f32.mrf.mxu0
      %v1190 = vadd.f32 %v1128, %v1189
      %1191 = vmatmul.bf16.gmra.mxu0 %v1148
      %v1192 = vpop.f32.mrf.mxu0
      %v1193 = vadd.f32 %v1128, %v1192
      %v1194 = vpop.f32.mrf.mxu0
      %v1195 = vadd.f32 %v1128, %v1194
      %1196 = vmatmul.bf16.gmra.mxu0 %v1150
      %v1197 = vpop.f32.mrf.mxu0
      %v1198 = vadd.f32 %v1128, %v1197
      %v1199 = vpop.f32.mrf.mxu0
      %v1200 = vadd.f32 %v1128, %v1199
      %1201 = vmatmul.bf16.gmra.mxu0 %v1152
      %v1202 = vpop.f32.mrf.mxu0
      %v1203 = vadd.f32 %v1128, %v1202
      %v1204 = vpop.f32.mrf.mxu0
      %v1205 = vadd.f32 %v1128, %v1204
      %1206 = vmatmul.bf16.gmra.mxu0 %v1154
      %v1207 = vpop.f32.mrf.mxu0
      %v1208 = vadd.f32 %v1128, %v1207
      %v1209 = vpop.f32.mrf.mxu0
      %v1210 = vadd.f32 %v1128, %v1209
      %1211 = vmatmul.bf16.gmra.mxu0 %v1156
      %v1212 = vpop.f32.mrf.mxu0
      %v1213 = vadd.f32 %v1128, %v1212
      %v1214 = vpop.f32.mrf.mxu0
      %v1215 = vadd.f32 %v1128, %v1214
      %1216 = vmatmul.bf16.gmra.mxu0 %v1158
      %v1217 = vpop.f32.mrf.mxu0
      %v1218 = vadd.f32 %v1128, %v1217
      %v1219 = vpop.f32.mrf.mxu0
      %v1220 = vadd.f32 %v1128, %v1219
      %1221 = vmatmul.bf16.gmra.mxu0 %v1160
      %v1222 = vpop.f32.mrf.mxu0
      %v1223 = vadd.f32 %v1128, %v1222
      %v1224 = vpop.f32.mrf.mxu0
      %v1225 = vadd.f32 %v1128, %v1224
      %1226 = vmatmul.bf16.gmra.mxu0 %v1162
      %v1227 = vpop.f32.mrf.mxu0
      %v1228 = vadd.f32 %v1128, %v1227
      %v1229 = vpop.f32.mrf.mxu0
      %v1230 = vadd.f32 %v1128, %v1229
      %1231 = vmatmul.bf16.gmra.mxu0 %v1164
      %v1232 = vpop.f32.mrf.mxu0
      %v1233 = vadd.f32 %v1128, %v1232
      %v1234 = vpop.f32.mrf.mxu0
      %v1235 = vadd.f32 %v1128, %v1234
      %1236 = vmatmul.bf16.gmra.mxu0 %v1166
      %v1237 = vpop.f32.mrf.mxu0
      %v1238 = vadd.f32 %v1128, %v1237
      %v1239 = vpop.f32.mrf.mxu0
      %v1240 = vadd.f32 %v1128, %v1239
      %1241 = vmatmul.bf16.gmra.mxu0 %v1168
      %v1242 = vpop.f32.mrf.mxu0
      %v1243 = vadd.f32 %v1128, %v1242
      %v1244 = vpop.f32.mrf.mxu0
      %v1245 = vadd.f32 %v1128, %v1244
      %1246 = vmatmul.bf16.gmra.mxu0 %v1170
      %v1247 = vpop.f32.mrf.mxu0
      %v1248 = vadd.f32 %v1128, %v1247
      %v1249 = vpop.f32.mrf.mxu0
      %v1250 = vadd.f32 %v1128, %v1249
      %1251 = vmatmul.bf16.gmra.mxu0 %v1172
      %v1252 = vpop.f32.mrf.mxu0
      %v1253 = vadd.f32 %v1128, %v1252
      %v1254 = vpop.f32.mrf.mxu0
      %v1255 = vadd.f32 %v1128, %v1254
      %1256 = vdwg.mxu0
      %v1257 = vmax.f32 %v1188, 0.0
      %v1258 = vmax.f32 %v1190, 0.0
      %v1259 = vmax.f32 %v1193, 0.0
      %v1260 = vmax.f32 %v1195, 0.0
      %v1261 = vmax.f32 %v1198, 0.0
      %v1262 = vmax.f32 %v1200, 0.0
      %v1263 = vmax.f32 %v1203, 0.0
      %v1264 = vmax.f32 %v1205, 0.0
      %v1265 = vmax.f32 %v1208, 0.0
      %v1266 = vmax.f32 %v1210, 0.0
      %v1267 = vmax.f32 %v1213, 0.0
      %v1268 = vmax.f32 %v1215, 0.0
      %v1269 = vmax.f32 %v1218, 0.0
      %v1270 = vmax.f32 %v1220, 0.0
      %v1271 = vmax.f32 %v1223, 0.0
      %v1272 = vmax.f32 %v1225, 0.0
      %v1273 = vmax.f32 %v1228, 0.0
      %v1274 = vmax.f32 %v1230, 0.0
      %v1275 = vmax.f32 %v1233, 0.0
      %v1276 = vmax.f32 %v1235, 0.0
      %v1277 = vmax.f32 %v1238, 0.0
      %v1278 = vmax.f32 %v1240, 0.0
      %v1279 = vmax.f32 %v1243, 0.0
      %v1280 = vmax.f32 %v1245, 0.0
      %v1281 = vmax.f32 %v1248, 0.0
      %v1282 = vmax.f32 %v1250, 0.0
      %v1283 = vmax.f32 %v1253, 0.0
      %v1284 = vmax.f32 %v1255, 0.0
      %v1285 = vpack.c.bf16 %v1257, %v1257
      %v1286 = vpack.c.bf16 %v1258, %v1258
      %v1287 = vpack.c.bf16 %v1259, %v1259
      %v1288 = vpack.c.bf16 %v1260, %v1260
      %v1289 = vpack.c.bf16 %v1261, %v1261
      %v1290 = vpack.c.bf16 %v1262, %v1262
      %v1291 = vpack.c.bf16 %v1263, %v1263
      %v1292 = vpack.c.bf16 %v1264, %v1264
      %v1293 = vpack.c.bf16 %v1265, %v1265
      %v1294 = vpack.c.bf16 %v1266, %v1266
      %v1295 = vpack.c.bf16 %v1267, %v1267
      %v1296 = vpack.c.bf16 %v1268, %v1268
      %v1297 = vpack.c.bf16 %v1269, %v1269
      %v1298 = vpack.c.bf16 %v1270, %v1270
      %v1299 = vpack.c.bf16 %v1271, %v1271
      %v1300 = vpack.c.bf16 %v1272, %v1272
      %v1301 = vpack.c.bf16 %v1273, %v1273
      %v1302 = vpack.c.bf16 %v1274, %v1274
      %v1303 = vpack.c.bf16 %v1275, %v1275
      %v1304 = vpack.c.bf16 %v1276, %v1276
      %v1305 = vpack.c.bf16 %v1277, %v1277
      %v1306 = vpack.c.bf16 %v1278, %v1278
      %v1307 = vpack.c.bf16 %v1279, %v1279
      %v1308 = vpack.c.bf16 %v1280, %v1280
      %v1309 = vpack.c.bf16 %v1281, %v1281
      %v1310 = vpack.c.bf16 %v1282, %v1282
      %v1311 = vpack.c.bf16 %v1283, %v1283
      %v1312 = vpack.c.bf16 %v1284, %v1284
      %vm1313 = vcmask 60416
      %1314 = vst.msk [vmem:[%s274] sm:$0xf] %vm1313, %v1285
      %1315 = vst.msk [vmem:[%s274 + $0x4] sm:$0xf] %vm1313, %v1286
      %1316 = vst.msk [vmem:[%s274 + $0x8] sm:$0xf] %vm1313, %v1287
      %1317 = vst.msk [vmem:[%s274 + $0xc] sm:$0xf] %vm1313, %v1288
      %1318 = vst.msk [vmem:[%s274 + $0x10] sm:$0xf] %vm1313, %v1289
      %1319 = vst.msk [vmem:[%s274 + $0x14] sm:$0xf] %vm1313, %v1290
      %1320 = vst.msk [vmem:[%s274 + $0x18] sm:$0xf] %vm1313, %v1291
      %1321 = vst.msk [vmem:[%s274 + $0x1c] sm:$0xf] %vm1313, %v1292
      %1322 = vst.msk [vmem:[%s274 + $0x20] sm:$0xf] %vm1313, %v1293
      %1323 = vst.msk [vmem:[%s274 + $0x24] sm:$0xf] %vm1313, %v1294
      %1324 = vst.msk [vmem:[%s274 + $0x28] sm:$0xf] %vm1313, %v1295
      %1325 = vst.msk [vmem:[%s274 + $0x2c] sm:$0xf] %vm1313, %v1296
      %1326 = vst.msk [vmem:[%s274 + $0x30] sm:$0xf] %vm1313, %v1297
      %1327 = vst.msk [vmem:[%s274 + $0x34] sm:$0xf] %vm1313, %v1298
      %1328 = vst.msk [vmem:[%s274 + $0x38] sm:$0xf] %vm1313, %v1299
      %1329 = vst.msk [vmem:[%s274 + $0x3c] sm:$0xf] %vm1313, %v1300
      %1330 = vst.msk [vmem:[%s274 + $0x40] sm:$0xf] %vm1313, %v1301
      %1331 = vst.msk [vmem:[%s274 + $0x44] sm:$0xf] %vm1313, %v1302
      %1332 = vst.msk [vmem:[%s274 + $0x48] sm:$0xf] %vm1313, %v1303
      %1333 = vst.msk [vmem:[%s274 + $0x4c] sm:$0xf] %vm1313, %v1304
      %1334 = vst.msk [vmem:[%s274 + $0x50] sm:$0xf] %vm1313, %v1305
      %1335 = vst.msk [vmem:[%s274 + $0x54] sm:$0xf] %vm1313, %v1306
      %1336 = vst.msk [vmem:[%s274 + $0x58] sm:$0xf] %vm1313, %v1307
      %1337 = vst.msk [vmem:[%s274 + $0x5c] sm:$0xf] %vm1313, %v1308
      %1338 = vst.msk [vmem:[%s274 + $0x60] sm:$0xf] %vm1313, %v1309
      %1339 = vst.msk [vmem:[%s274 + $0x64] sm:$0xf] %vm1313, %v1310
      %1340 = vst.msk [vmem:[%s274 + $0x68] sm:$0xf] %vm1313, %v1311
      %1341 = vst.msk [vmem:[%s274 + $0x6c] sm:$0xf] %vm1313, %v1312
      %p1342 = scmp.lt.s32.totalorder %s19, 1
      %s1343 = scalar_select %p1342, %s19, 1
      %p1344 = scmp.lt.s32.totalorder %s20, 0
      %s1345 = scalar_select %p1344, %s20, 0
      %s1346 = smul.addr %s1345, 28
      %s1347 = smul.addr %s1343, 28
      %s1348 = sadd.s32 %s1346, %s1347
      %s1349 = smul.addr %s1348, 4
      %s1350 = scalar_lea.vmem %s4, %s1349
      // Predicated region
      $region37: #{tpu_custom_call.1} parent=35 // pred_check
        %p1351 = pneg %p147
      $region38: #{tpu_custom_call.1} parent=35 // pred_check_branch
        %1353 = sbr.rel (%p1351) target = $region40
      $region39: #{tpu_custom_call.1} parent=35 // pred_region
        _
      $region40: #{tpu_custom_call.1} parent=35 // pred_fallthru
        _
    $region36: #{tpu_custom_call.1} parent=5 // pred_fallthru
      _
    %p1354 = scmp.le.s32.totalorder 2, %s10
    // Predicated region
    $region41: #{tpu_custom_call.1} parent=5 // pred_check
      %p1355 = pneg %p1354
    $region42: #{tpu_custom_call.1} parent=5 // pred_check_branch
      %1357 = sbr.rel (%p1355) target = $region44
    $region43: #{tpu_custom_call.1} parent=5 // pred_region
      %s1358 = ssub.s32 %s10, 2
      // Predicated region
      $region45: #{tpu_custom_call.1} parent=43 // pred_check
        %p1359 = pneg %p153
      $region46: #{tpu_custom_call.1} parent=43 // pred_check_branch
        %1361 = sbr.rel (%p1359) target = $region48
      $region47: #{tpu_custom_call.1} parent=43 // pred_region
        %p1362 = scmp.lt.s32.totalorder %s21, 1
        %s1363 = scalar_select %p1362, %s21, 1
        %p1364 = scmp.lt.s32.totalorder %s22, 0
        %s1365 = scalar_select %p1364, %s22, 0
        %s1366 = smul.addr %s1365, 28
        %s1367 = smul.addr %s1363, 28
        %s1368 = sadd.s32 %s1366, %s1367
        %s1369 = smul.addr %s1368, 4
        %s1370 = scalar_lea.vmem %s4, %s1369
      $region48: #{tpu_custom_call.1} parent=43 // pred_fallthru
        _
    $region44: #{tpu_custom_call.1} parent=5 // pred_fallthru
      _
  $region6: #{tpu_custom_call.1} parent=0 // loop_footer
    %s14 = sadd.s32 1, %s10
  $region7: #{tpu_custom_call.1} parent=0 // loop_footer_branch
    %9 = sbr.rel target = $region3
  $region8: #{tpu_custom_call.1} parent=0 // loop_exit
    _

</llo_original>
